<compile_context>
chip_gen: v7x
topology: tpu7x:2x2x1
jax: 0.10.0
libtpu: 0.0.40
codegen_flags: <defaults>
</compile_context>

<pallas_src>
import jax
import jax.numpy as jnp
from jax import lax
from jax.experimental import pallas as pl
from jax.experimental.pallas import tpu as pltpu


# ------------------------------ kernels -------------------------------------


def _make_gram_softmax_kernel(tc, nc):
    """Pass 1: accumulate a (tc, C) block of A @ A^T over HW tiles directly into
    the resident output block; apply row-wise softmax(rowmin - att) at the last
    HW step (== softmax(rowmax(att) - att) by shift invariance)."""

    def kernel(x_ref, p_ref):
        k = pl.program_id(2)

        @pl.when(k == 0)
        def _():
            p_ref[...] = jnp.zeros_like(p_ref)

        a_full = x_ref[0]                                   # (C, tk), network dtype
        if nc == 1:
            a_rows = a_full                                 # tc == C: no slice needed
        else:
            off = pl.multiple_of(pl.program_id(1) * tc, tc)
            a_rows = x_ref[0, pl.ds(off, tc), :]            # (tc, tk), sublane-aligned

        # Contract the HW tile (last dim of BOTH operands): no explicit transpose.
        # HIGHEST => full-f32 MXU contraction (the softmax exponents need it).
        p_ref[0] += lax.dot_general(
            a_rows, a_full,
            dimension_numbers=(((1,), (1,)), ((), ())),
            preferred_element_type=jnp.float32,
            precision=lax.Precision.HIGHEST,
        )

        @pl.when(k == pl.num_programs(2) - 1)
        def _():
            att = p_ref[0]                                  # (tc, C) f32
            m = jnp.min(att, axis=-1, keepdims=True)        # softmax(rowmin - att)
            e = jnp.exp(m - att)
            denom = jnp.sum(e, axis=-1, keepdims=True)
            p_ref[0] = e / denom                            # exact divide

    return kernel


def _project_kernel(beta_ref, p_ref, x_ref, o_ref):
    """Pass 2: out_tile = beta * (P @ A_tile) + A_tile for one (C, tk) HW tile."""
    a = x_ref[0]                                            # (C, tk), network dtype
    p = p_ref[0].astype(a.dtype)                            # (C, C)  (no-op for f32)
    feat_e = jnp.dot(p, a,
                     preferred_element_type=jnp.float32,
                     precision=lax.Precision.HIGHEST)
    beta = beta_ref[0]
    o_ref[0] = (beta * feat_e + a.astype(jnp.float32)).astype(o_ref.dtype)


# ------------------------------ helpers -------------------------------------


def _pick_hw_tile(hw, max_tile=1024):
    """Return (tile, padded_hw). Tile is a multiple of 128; HW is padded UP to a
    multiple of the tile (zero padding is exact for this op) so the tile stays
    large even for awkward HW sizes."""
    hw128 = ((hw + 127) // 128) * 128
    if hw128 <= max_tile:
        return hw128, hw128
    lo = 512 if max_tile >= 512 else 128
    best_tile, best_pad = None, None
    for t in range(max_tile, lo - 1, -128):
        padded = ((hw + t - 1) // t) * t
        if best_pad is None or padded < best_pad:
            best_tile, best_pad = t, padded
    return best_tile, best_pad


def _pick_row_tile(c):
    """Row-block size for pass 1. Keep the whole (C, C) Gram resident whenever it
    fits comfortably (C <= 1024); only row-block beyond that."""
    if c <= 1024:
        return c
    for cand in (512, 256, 128):
        if c % cand == 0:
            return cand
    return c


def _vmem_limit(nbytes):
    """Clamp an explicit scoped-VMEM request (v5e default is only 16 MiB)."""
    return int(min(max(nbytes, 16 << 20), 64 << 20))


# ------------------------------ wrapper -------------------------------------


def channel_attention_da(x, beta, *, hw_tile_max=1024):
    """x: (B, C, H, W), beta: (1,) float32. Returns (B, C, H, W)."""
    B, C, H, W = x.shape
    HW = H * W
    itemsize = x.dtype.itemsize

    tk, HWp = _pick_hw_tile(HW, hw_tile_max)
    x_flat = x.reshape(B, C, HW)
    if HWp != HW:
        x_flat = jnp.pad(x_flat, ((0, 0), (0, 0), (0, HWp - HW)))

    nk = HWp // tk
    tc = _pick_row_tile(C)
    nc = C // tc

    # ---- pass 1: attention = softmax(rowmax(A A^T) - A A^T)  -> (B, C, C) f32
    p1_vmem = 2 * C * tk * itemsize + 2 * tc * C * 4 + (4 << 20)
    attn = pl.pallas_call(
        _make_gram_softmax_kernel(tc, nc),
        out_shape=jax.ShapeDtypeStruct((B, C, C), jnp.float32),
        grid_spec=pltpu.PrefetchScalarGridSpec(
            num_scalar_prefetch=0,
            grid=(B, nc, nk),
            in_specs=[
                pl.BlockSpec((1, C, tk), lambda b, i, k: (b, 0, k)),  # x, once
            ],
            out_specs=pl.BlockSpec((1, tc, C), lambda b, i, k: (b, i, 0)),
        ),
        compiler_params=pltpu.CompilerParams(
            dimension_semantics=("parallel", "parallel", "arbitrary"),
            vmem_limit_bytes=_vmem_limit(p1_vmem),
        ),
        cost_estimate=pl.CostEstimate(
            flops=2 * B * C * C * HWp,
            transcendentals=B * C * C,
            bytes_accessed=B * nc * C * HWp * itemsize + B * C * C * 4,
        ),
    )(x_flat)

    # ---- pass 2: out = beta * (P @ A) + A, streamed over HW tiles
    p2_vmem = 2 * C * C * 4 + 4 * C * tk * itemsize + (4 << 20)
    out_flat = pl.pallas_call(
        _project_kernel,
        out_shape=jax.ShapeDtypeStruct((B, C, HWp), x.dtype),
        grid_spec=pltpu.PrefetchScalarGridSpec(
            num_scalar_prefetch=0,
            grid=(B, nk),
            in_specs=[
                pl.BlockSpec(memory_space=pltpu.SMEM),                # beta
                pl.BlockSpec((1, C, C), lambda b, n: (b, 0, 0)),      # attention
                pl.BlockSpec((1, C, tk), lambda b, n: (b, 0, n)),     # x tile
            ],
            out_specs=pl.BlockSpec((1, C, tk), lambda b, n: (b, 0, n)),
        ),
        compiler_params=pltpu.CompilerParams(
            dimension_semantics=("parallel", "parallel"),
            vmem_limit_bytes=_vmem_limit(p2_vmem),
        ),
        cost_estimate=pl.CostEstimate(
            flops=2 * B * C * C * HWp + 3 * B * C * HWp,
            transcendentals=0,
            bytes_accessed=B * C * C * 4 + 2 * B * C * HWp * itemsize,
        ),
    )(beta, attn, x_flat)

    if HWp != HW:
        out_flat = out_flat[:, :, :HW]
    return out_flat.reshape(B, C, H, W)


# ------------------------------ reference -----------------------------------


def channel_attention_da_ref(x, beta):
    """Pure-JAX reference mirroring the PyTorch forward (full-f32 matmuls)."""
    B, C, H, W = x.shape
    feat_a = x.reshape(B, C, H * W).astype(jnp.float32)
    attention = jnp.einsum("bcn,bdn->bcd", feat_a, feat_a,
                           precision=lax.Precision.HIGHEST)
    attention_new = jnp.max(attention, axis=-1, keepdims=True) - attention
    attention = jax.nn.softmax(attention_new, axis=-1)
    feat_e = jnp.einsum("bcd,bdn->bcn", attention, feat_a,
                        precision=lax.Precision.HIGHEST).reshape(B, C, H, W)
    return (beta[0] * feat_e + x.astype(jnp.float32)).astype(x.dtype)


# -------------------------------- main --------------------------------------


if __name__ == "__main__":
    key = jax.random.PRNGKey(0)

    # ---- case 1: small canonical shape, beta = 0 (module init) and beta != 0
    B, C, H, W = 2, 4, 16, 16
    x = jax.random.normal(key, (B, C, H, W), dtype=jnp.float32)

    beta0 = jnp.zeros((1,), dtype=jnp.float32)
    out0 = channel_attention_da(x, beta0)
    jax.block_until_ready(out0)
    ref0 = channel_attention_da_ref(x, beta0)
    assert jnp.allclose(out0, ref0, atol=1e-5, rtol=1e-5), "mismatch with beta=0"

    beta_nz = jnp.full((1,), 0.5, dtype=jnp.float32)
    out_nz = channel_attention_da(x, beta_nz)
    jax.block_until_ready(out_nz)
    ref_nz = channel_attention_da_ref(x, beta_nz)
    assert jnp.allclose(out_nz, ref_nz, atol=2e-3, rtol=2e-3), "mismatch with beta=0.5"

    # ---- case 2: non-128-aligned spatial size exercises the HW padding path
    k2 = jax.random.PRNGKey(1)
    x2 = jax.random.normal(k2, (1, 8, 10, 13), dtype=jnp.float32)
    beta2 = jnp.full((1,), 0.3, dtype=jnp.float32)
    out2 = channel_attention_da(x2, beta2)
    jax.block_until_ready(out2)
    ref2 = channel_attention_da_ref(x2, beta2)
    assert jnp.allclose(out2, ref2, atol=2e-3, rtol=2e-3), "mismatch on padded HW"

    # ---- case 3: larger C / multi-tile HW exercises the HW-tile accumulation
    k3 = jax.random.PRNGKey(2)
    x3 = jax.random.normal(k3, (1, 256, 36, 36), dtype=jnp.float32)
    beta3 = jnp.full((1,), 1.0, dtype=jnp.float32)
    out3 = channel_attention_da(x3, beta3)
    jax.block_until_ready(out3)
    ref3 = channel_attention_da_ref(x3, beta3)
    assert jnp.allclose(out3, ref3, atol=2e-3, rtol=2e-3), "mismatch on tiled shape"

    print("KERNEL_OK")
</pallas_src>

<mosaic_0001>
module attributes {stable_mosaic.version = 11 : i64} {
  func.func @kernel(%arg0: i32, %arg1: i32, %arg2: i32, %arg3: memref<1x4x256xf32, #tpu.memory_space<vmem>>, %arg4: memref<1x4x4xf32, #tpu.memory_space<vmem>>) attributes {dimension_semantics = [#tpu.dimension_semantics<parallel>, #tpu.dimension_semantics<parallel>, #tpu.dimension_semantics<arbitrary>], iteration_bounds = array<i64: 2, 1, 1>, scalar_prefetch = 0 : i64, scratch_operands = 0 : i64, tpu.core_type = #tpu.core_type<tc>, window_params = [{transform_indices = @transform_0, window_bounds = array<i64: 1, 4, 256>}, {transform_indices = @transform_1, window_bounds = array<i64: 1, 4, 4>}]} {
    %c0_i32 = arith.constant 0 : i32
    %0 = arith.cmpi eq, %arg2, %c0_i32 : i32
    %1 = arith.extui %0 : i1 to i32
    %c0_i32_0 = arith.constant 0 : i32
    %2 = arith.cmpi ne, %1, %c0_i32_0 : i32
    scf.if %2 {
      %cst_11 = arith.constant 0.000000e+00 : f32
      %15 = vector.broadcast %cst_11 : f32 to vector<1x4x4xf32>
      %c0_12 = arith.constant 0 : index
      %c0_13 = arith.constant 0 : index
      %c0_14 = arith.constant 0 : index
      %16 = vector.load %arg4[%c0_12, %c0_13, %c0_14] : memref<1x4x4xf32, #tpu.memory_space<vmem>>, vector<1x4x4xf32>
      tpu.vector_store %arg4[%c0_12, %c0_13, %c0_14], %15 {strides = array<i32>} : memref<1x4x4xf32, #tpu.memory_space<vmem>>, vector<1x4x4xf32>,
    } else {
    }
    %c0 = arith.constant 0 : index
    %c0_1 = arith.constant 0 : index
    %c0_2 = arith.constant 0 : index
    %3 = vector.load %arg3[%c0, %c0_1, %c0_2] : memref<1x4x256xf32, #tpu.memory_space<vmem>>, vector<1x4x256xf32>
    %4 = vector.shape_cast %3 : vector<1x4x256xf32> to vector<4x256xf32>
    %c0_3 = arith.constant 0 : index
    %c0_4 = arith.constant 0 : index
    %c0_5 = arith.constant 0 : index
    %5 = vector.load %arg4[%c0_3, %c0_4, %c0_5] : memref<1x4x4xf32, #tpu.memory_space<vmem>>, vector<1x4x4xf32>
    %6 = vector.shape_cast %5 : vector<1x4x4xf32> to vector<4x4xf32>
    %cst = arith.constant dense<0.000000e+00> : vector<4x4xf32>
    %7 = tpu.matmul %4, %4, %cst {dimension_numbers = #tpu.dot_dimension_numbers<[1], [1], [0], [0], [0, 0, 1, 0], [], []>, precision = #tpu.contract_precision<fp32>} : vector<4x256xf32>, vector<4x256xf32>, vector<4x4xf32> -> vector<4x4xf32>
    %8 = arith.addf %6, %7 : vector<4x4xf32>
    %c0_6 = arith.constant 0 : index
    %c0_7 = arith.constant 0 : index
    %c0_8 = arith.constant 0 : index
    %9 = vector.load %arg4[%c0_6, %c0_7, %c0_8] : memref<1x4x4xf32, #tpu.memory_space<vmem>>, vector<1x4x4xf32>
    %10 = vector.shape_cast %9 : vector<1x4x4xf32> to vector<4x4xf32>
    %11 = vector.shape_cast %8 : vector<4x4xf32> to vector<1x4x4xf32>
    tpu.vector_store %arg4[%c0_6, %c0_7, %c0_8], %11 {strides = array<i32>} : memref<1x4x4xf32, #tpu.memory_space<vmem>>, vector<1x4x4xf32>,
    %c0_i32_9 = arith.constant 0 : i32
    %12 = arith.cmpi eq, %arg2, %c0_i32_9 : i32
    %13 = arith.extui %12 : i1 to i32
    %c0_i32_10 = arith.constant 0 : i32
    %14 = arith.cmpi ne, %13, %c0_i32_10 : i32
    scf.if %14 {
      %c0_11 = arith.constant 0 : index
      %c0_12 = arith.constant 0 : index
      %c0_13 = arith.constant 0 : index
      %15 = vector.load %arg4[%c0_11, %c0_12, %c0_13] : memref<1x4x4xf32, #tpu.memory_space<vmem>>, vector<1x4x4xf32>
      %16 = vector.shape_cast %15 : vector<1x4x4xf32> to vector<4x4xf32>
      %cst_14 = arith.constant dense<0x7F800000> : vector<4xf32>
      %17 = vector.multi_reduction <minimumf>, %16, %cst_14 [1] : vector<4x4xf32> to vector<4xf32>
      %18 = vector.shape_cast %17 : vector<4xf32> to vector<4x1xf32>
      %19 = vector.broadcast %18 : vector<4x1xf32> to vector<4x4xf32>
      %20 = arith.subf %19, %16 : vector<4x4xf32>
      %21 = math.exp %20 : vector<4x4xf32>
      %cst_15 = arith.constant dense<0.000000e+00> : vector<4xf32>
      %22 = vector.multi_reduction <add>, %21, %cst_15 [1] : vector<4x4xf32> to vector<4xf32>
      %23 = vector.shape_cast %22 : vector<4xf32> to vector<4x1xf32>
      %24 = vector.broadcast %23 : vector<4x1xf32> to vector<4x4xf32>
      %25 = arith.divf %21, %24 : vector<4x4xf32>
      %c0_16 = arith.constant 0 : index
      %c0_17 = arith.constant 0 : index
      %c0_18 = arith.constant 0 : index
      %26 = vector.load %arg4[%c0_16, %c0_17, %c0_18] : memref<1x4x4xf32, #tpu.memory_space<vmem>>, vector<1x4x4xf32>
      %27 = vector.shape_cast %26 : vector<1x4x4xf32> to vector<4x4xf32>
      %28 = vector.shape_cast %25 : vector<4x4xf32> to vector<1x4x4xf32>
      tpu.vector_store %arg4[%c0_16, %c0_17, %c0_18], %28 {strides = array<i32>} : memref<1x4x4xf32, #tpu.memory_space<vmem>>, vector<1x4x4xf32>,
    } else {
    }
    return
  }
  func.func @transform_0(%arg0: i32, %arg1: i32, %arg2: i32) -> (i32, i32, i32) {
    %c0_i32 = arith.constant 0 : i32
    %c0_i32_0 = arith.constant 0 : i32
    return %arg0, %c0_i32, %arg2 : i32, i32, i32
  }
  func.func @transform_1(%arg0: i32, %arg1: i32, %arg2: i32) -> (i32, i32, i32) {
    %c0_i32 = arith.constant 0 : i32
    %c0_i32_0 = arith.constant 0 : i32
    return %arg0, %arg1, %c0_i32 : i32, i32, i32
  }
}

</mosaic_0001>

<llo_original>
// kernel: tpu_custom_call.1
$region0: #{tpu_custom_call.1}
  #allocation0 [shape = 'u32[]', space=smem, size = 0x4, offset = 0x4, fixed_abs, tag = 'smem constant byte address 0x4 - core index']
  #allocation1 [shape = 'u32[144,128]{1,0:T(1,128)}', space=vmem, size = 0x12000, scoped, tag = 'internal scratch']
  %s0 = inlined_call_operand.hbm [shape: f32[2,4,256], index: 0, kind: input, shape index: {}]
  %s1 = inlined_call_operand.hbm [shape: f32[2,4,4], index: 1, kind: output, shape index: {}]
  %s2 = sld [smem:[#allocation0]]
  $region49: #{tpu_custom_call.1} parent=0
    _
  %s4 = ssub.s32 1, %s2
  %s5 = scalar_select 0, %s4, %s2
  $region1: #{tpu_custom_call.1} parent=0
    #allocation2 [shape = 'u8[8192]{0}', space=vmem, size = 0x2000, scoped, tag = 'input window, operand 0']
    #allocation3 [shape = 's32[2]{0}', space=sflag, size = 0x8, scoped, tag = 'scoped memory for tpu_custom_call.1']
    #allocation4 [shape = 's32[2]{0}', space=sflag, size = 0x8, scoped, tag = 'scoped memory for tpu_custom_call.1']
    #allocation5 [shape = 'u8[4096]{0}', space=vmem, size = 0x1000, scoped, tag = 'output window, operand 0']
    %6 = vsyncpa [#allocation3], 0
    %s7 = scalar_lea.sflag [#allocation3], 1
    %8 = vsyncpa %s7, 0
    %9 = vsyncpa [#allocation4], 0
    %s10 = scalar_lea.sflag [#allocation4], 1
    %11 = vsyncpa %s10, 0
    loop: start=0, step=1, limit=4
    $region2: #{tpu_custom_call.1} parent=1 // loop_pre_header
      _
    $region3: #{tpu_custom_call.1} parent=1 // loop_header
      %s13 = sphi 0, %s17
      %p14 = scmp.ge.s32.totalorder %s13, 4
      %s20 = sphi 0, %s39
      %s21 = sphi 0, %s35
      %s22 = sphi 0, %s31
      %s23 = sphi 0, %s20
      %s24 = sphi 0, %s21
      %s25 = sphi 0, %s22
      %s26 = sphi 0, %s23
      %s27 = sphi 0, %s24
      %s28 = sphi 0, %s25
      %s44 = sphi 0, %s46
      %s47 = sphi 0, %s44
      %s48 = sphi 0, %s47
      %s64 = sphi 0, %s48
      %s72 = sphi 0, %s74
      %s75 = sphi 0, %s72
      %s76 = sphi 0, %s75
      %s92 = sphi 0, %s76
    $region4: #{tpu_custom_call.1} parent=1 // loop_header_branch
      %16 = sbr.rel (%p14) target = $region8
    $region5: #{tpu_custom_call.1} parent=1 // loop_body
      %s18 = ssub.s32 %s13, 1
      %s19 = ssub.s32 %s13, 2
      %s29 = sadd.s32 1, %s22
      %p30 = scmp.ge.s32.totalorder %s29, 1
      %s31 = scalar_select %p30, 0, %s29
      %s32 = sadd.s32 1, %s21
      %s33 = scalar_select %p30, %s32, %s21
      %p34 = scmp.ge.s32.totalorder %s33, 1
      %s35 = scalar_select %p34, 0, %s33
      %s36 = sadd.s32 1, %s20
      %s37 = scalar_select %p34, %s36, %s20
      %p38 = scmp.ge.s32.totalorder %s37, 2
      %s39 = scalar_select %p38, 0, %s37
      %s40 = ssub.s32 %s20, %s39
      %s41 = ssub.s32 %s22, %s31
      %s42 = sor.u32 %s40, %s41
      %p43 = scmp.eq.s32.totalorder %s42, 0
      %s45 = sadd.s32 %s44, 1
      %s46 = scalar_select %p43, %s44, %s45
      %p49 = pneg %p43
      %p50 = scmp.eq.s32.totalorder %s13, 1
      %p51 = por %p49, %p50
      %p52 = scmp.ne.s32.totalorder %s44, %s47
      %p53 = scmp.eq.s32.totalorder %s13, 0
      %p54 = por %p52, %p53
      %p55 = scmp.ne.s32.totalorder %s44, %s47
      %p56 = scmp.eq.s32.totalorder %s18, 1
      %p57 = por %p55, %p56
      %p58 = scmp.ne.s32.totalorder %s47, %s48
      %p59 = scmp.eq.s32.totalorder %s18, 0
      %p60 = por %p58, %p59
      %p61 = scmp.ne.s32.totalorder %s47, %s48
      %p62 = scmp.eq.s32.totalorder %s19, 1
      %p63 = por %p61, %p62
      %p65 = scmp.ne.s32.totalorder %s48, %s64
      %p66 = scmp.eq.s32.totalorder %s19, 0
      %p67 = por %p65, %p66
      %s68 = ssub.s32 %s20, %s39
      %s69 = ssub.s32 %s21, %s35
      %s70 = sor.u32 %s68, %s69
      %p71 = scmp.eq.s32.totalorder %s70, 0
      %s73 = sadd.s32 %s72, 1
      %s74 = scalar_select %p71, %s72, %s73
      %p77 = pneg %p71
      %p78 = scmp.eq.s32.totalorder %s13, 1
      %p79 = por %p77, %p78
      %p80 = scmp.ne.s32.totalorder %s72, %s75
      %p81 = scmp.eq.s32.totalorder %s13, 0
      %p82 = por %p80, %p81
      %p83 = scmp.ne.s32.totalorder %s72, %s75
      %p84 = scmp.eq.s32.totalorder %s18, 1
      %p85 = por %p83, %p84
      %p86 = scmp.ne.s32.totalorder %s75, %s76
      %p87 = scmp.eq.s32.totalorder %s18, 0
      %p88 = por %p86, %p87
      %p89 = scmp.ne.s32.totalorder %s75, %s76
      %p90 = scmp.eq.s32.totalorder %s19, 1
      %p91 = por %p89, %p90
      %p93 = scmp.ne.s32.totalorder %s76, %s92
      %p94 = scmp.eq.s32.totalorder %s19, 0
      %p95 = por %p93, %p94
      %p96 = scmp.le.s32.totalorder 1, %s13
      %p97 = scmp.lt.s32.totalorder %s13, 3
      %p98 = pnand %p96, %p97
      %p99 = pneg %p98
      // Predicated region
      $region9: #{tpu_custom_call.1} parent=5 // pred_check
        _
      $region10: #{tpu_custom_call.1} parent=5 // pred_check_branch
        %101 = sbr.rel (%p98) target = $region12
      $region11: #{tpu_custom_call.1} parent=5 // pred_region
        %s102 = ssub.s32 %s13, 1
      $region12: #{tpu_custom_call.1} parent=5 // pred_fallthru
        _
      %p103 = scmp.lt.s32.totalorder %s13, 2
      // Predicated region
      $region13: #{tpu_custom_call.1} parent=5 // pred_check
        %p104 = pneg %p103
      $region14: #{tpu_custom_call.1} parent=5 // pred_check_branch
        %106 = sbr.rel (%p104) target = $region16
      $region15: #{tpu_custom_call.1} parent=5 // pred_region
        // Predicated region
        $region17: #{tpu_custom_call.1} parent=15 // pred_check
          %p107 = pneg %p54
        $region18: #{tpu_custom_call.1} parent=15 // pred_check_branch
          %109 = sbr.rel (%p107) target = $region20
        $region19: #{tpu_custom_call.1} parent=15 // pred_region
          %s110 = sand.u32 %s44, 1
          %s111 = scalar_lea.sflag [#allocation3], %s110
          %s112 = sand.u32 %s44, 1
          %s113 = smul.addr %s112, 8
          %s114 = scalar_lea.vmem [#allocation2], %s113
          %s115 = smul.u32 2, %s22
          %s117 = ssub.s32 128, 128
          %118 = vsyncadd %s111, %s117
          %s119 = smul.addr %s20, 2
          %s120 = sadd.s32 %s115, %s119
          %s121 = smul.addr %s120, 64
          %s122 = scalar_lea.hbm %s0, %s121
          %s124 = sshll.u32 %s114, 4
          %s125 = int_to_ptr.vmem [resolvable:$true] %s124
          %127 = dma.hbm_to_vmem [thread:$0]  %s122, 128, %s125, %s111
        $region20: #{tpu_custom_call.1} parent=15 // pred_fallthru
          _
      $region16: #{tpu_custom_call.1} parent=5 // pred_fallthru
        _
      %p128 = scmp.le.s32.totalorder 1, %s13
      %p129 = scmp.lt.s32.totalorder %s13, 3
      %p130 = pnand %p128, %p129
      %p131 = pneg %p130
      // Predicated region
      $region21: #{tpu_custom_call.1} parent=5 // pred_check
        _
      $region22: #{tpu_custom_call.1} parent=5 // pred_check_branch
        %133 = sbr.rel (%p130) target = $region24
      $region23: #{tpu_custom_call.1} parent=5 // pred_region
        %s134 = ssub.s32 %s13, 1
        %s135 = sand.u32 %s47, 1
        %s136 = scalar_lea.sflag [#allocation3], %s135
        %s137 = sand.u32 %s47, 1
        %s138 = smul.addr %s137, 8
        %s139 = scalar_lea.vmem [#allocation2], %s138
        // Predicated region
        $region25: #{tpu_custom_call.1} parent=23 // pred_check
          %p140 = pneg %p60
        $region26: #{tpu_custom_call.1} parent=23 // pred_check_branch
          %142 = sbr.rel (%p140) target = $region28
        $region27: #{tpu_custom_call.1} parent=23 // pred_region
          %143 = dma.done %s136, 128
        $region28: #{tpu_custom_call.1} parent=23 // pred_fallthru
          _
        %s144 = sand.u32 %s47, 1
        %s145 = scalar_lea.sflag [#allocation3], %s144
        %s146 = sand.u32 %s47, 1
        %s147 = smul.addr %s146, 8
        %s148 = scalar_lea.vmem [#allocation2], %s147
        %p149 = pneg %p60
        %p150 = pneg %p57
        %p151 = pneg %p88
        %p152 = pneg %p85
        %s153 = sand.u32 %s75, 1
        %s154 = scalar_lea.sflag [#allocation4], %s153
        %s155 = sand.u32 %s75, 1
        %s156 = smul.addr %s155, 4
        %s157 = scalar_lea.vmem [#allocation5], %s156
        %s158 = smul.u32 2, %s25
        %p159 = scmp.eq.s32.totalorder %s25, 0
        // Predicated region
        $region29: #{tpu_custom_call.1} parent=23 // pred_check
          %p160 = pneg %p159
        $region30: #{tpu_custom_call.1} parent=23 // pred_check_branch
          %162 = sbr.rel (%p160) target = $region32
        $region31: #{tpu_custom_call.1} parent=23 // pred_region
          %vm163 = vcmask 27648
          %164 = vst.msk [vmem:[%s157] sm:$0xf] %vm163, 0.0
        $region32: #{tpu_custom_call.1} parent=23 // pred_fallthru
          _
        %v165 = vld [vmem:[%s139] sm:$0xff]
        %v166 = vld [vmem:[%s157] sm:$0xf]
        %v168 = vcombine.high %v165, %v165
        %v170 = vand.u32 %v168, 4294901760
        %171 = vmatprep.subr.mxu0 %v170
        %v172 = vand.u32 %v165, 4294901760
        %173 = vmatpush1.xpose.msra.mxu0 %v172
        %174 = vmatprep.subr.mxu0 0.0
        %175 = vmatpush1.xpose.msra.mxu0 0.0
        %176 = vmatprep.subr.mxu0 0.0
        %177 = vmatpush1.xpose.msra.mxu0 0.0
        %178 = vmatprep.subr.mxu0 0.0
        %179 = vmatpush1.xpose.msra.mxu0 0.0
        %180 = vmatprep.subr.mxu0 0.0
        %181 = vmatpush1.xpose.msra.mxu0 0.0
        %182 = vmatprep.subr.mxu0 0.0
        %183 = vmatpush1.xpose.msra.mxu0 0.0
        %184 = vmatprep.subr.mxu0 0.0
        %185 = vmatpush1.xpose.msra.mxu0 0.0
        %186 = vmatprep.subr.mxu0 0.0
        %187 = vmatpush1.xpose.msra.mxu0 0.0
        %188 = vmatprep.subr.mxu0 0.0
        %189 = vmatpush1.xpose.msra.mxu0 0.0
        %190 = vmatprep.subr.mxu0 0.0
        %191 = vmatpush1.xpose.msra.mxu0 0.0
        %192 = vmatprep.subr.mxu0 0.0
        %193 = vmatpush1.xpose.msra.mxu0 0.0
        %194 = vmatprep.subr.mxu0 0.0
        %195 = vmatpush1.xpose.msra.mxu0 0.0
        %196 = vmatprep.subr.mxu0 0.0
        %197 = vmatpush1.xpose.msra.mxu0 0.0
        %198 = vmatprep.subr.mxu0 0.0
        %199 = vmatpush1.xpose.msra.mxu0 0.0
        %200 = vmatprep.subr.mxu0 0.0
        %201 = vmatpush1.xpose.msra.mxu0 0.0
        %202 = vmatprep.subr.mxu0 0.0
        %203 = vmatpush1.xpose.msra.mxu0 0.0
        %204 = vmatprep.subr.mxu0 0.0
        %205 = vmatpush1.xpose.msra.mxu0 0.0
        %206 = vmatprep.subr.mxu0 0.0
        %207 = vmatpush1.xpose.msra.mxu0 0.0
        %208 = vmatprep.subr.mxu0 0.0
        %209 = vmatpush1.xpose.msra.mxu0 0.0
        %210 = vmatprep.subr.mxu0 0.0
        %211 = vmatpush1.xpose.msra.mxu0 0.0
        %212 = vmatprep.subr.mxu0 0.0
        %213 = vmatpush1.xpose.msra.mxu0 0.0
        %214 = vmatprep.subr.mxu0 0.0
        %215 = vmatpush1.xpose.msra.mxu0 0.0
        %216 = vmatprep.subr.mxu0 0.0
        %217 = vmatpush1.xpose.msra.mxu0 0.0
        %218 = vmatprep.subr.mxu0 0.0
        %219 = vmatpush1.xpose.msra.mxu0 0.0
        %220 = vmatprep.subr.mxu0 0.0
        %221 = vmatpush1.xpose.msra.mxu0 0.0
        %222 = vmatprep.subr.mxu0 0.0
        %223 = vmatpush1.xpose.msra.mxu0 0.0
        %224 = vmatprep.subr.mxu0 0.0
        %225 = vmatpush1.xpose.msra.mxu0 0.0
        %226 = vmatprep.subr.mxu0 0.0
        %227 = vmatpush1.xpose.msra.mxu0 0.0
        %228 = vmatprep.subr.mxu0 0.0
        %229 = vmatpush1.xpose.msra.mxu0 0.0
        %230 = vmatprep.subr.mxu0 0.0
        %231 = vmatpush1.xpose.msra.mxu0 0.0
        %232 = vmatprep.subr.mxu0 0.0
        %233 = vmatpush1.xpose.msra.mxu0 0.0
        %234 = vmatprep.subr.mxu0 0.0
        %235 = vmatpush1.xpose.msra.mxu0 0.0
        %v236 = vand.u32 %v168, 4294901760
        %v237 = vsub.f32 %v168, %v236
        %v238 = vand.u32 %v237, 4294901760
        %v239 = vsub.f32 %v237, %v238
        %v240 = vand.u32 %v239, 4294901760
        %241 = vmatprep.mubr.f32.mxu0 %v240
        %v242 = vand.u32 %v165, 4294901760
        %v243 = vsub.f32 %v165, %v242
        %v244 = vand.u32 %v243, 4294901760
        %v245 = vsub.f32 %v243, %v244
        %v246 = vand.u32 %v245, 4294901760
        %247 = vmatmul.mubr.f32.gmra.mrb[0].mxu0 %v246
        %v248 = vpop.f32.mrb[0].mxu0
        %v249 = vadd.f32 0.0, %v248
        %v250 = vpop.f32.mrb[0].mxu0
        %251 = vdwg.mxu0
        %v252 = vand.u32 %v168, 4294901760
        %v253 = vsub.f32 %v168, %v252
        %v254 = vand.u32 %v253, 4294901760
        %v255 = vsub.f32 %v253, %v254
        %v256 = vand.u32 %v255, 4294901760
        %257 = vmatprep.subr.mxu0 %v256
        %v258 = vand.u32 %v165, 4294901760
        %v259 = vsub.f32 %v165, %v258
        %v260 = vand.u32 %v259, 4294901760
        %v261 = vsub.f32 %v259, %v260
        %v262 = vand.u32 %v261, 4294901760
        %263 = vmatpush1.xpose.msra.mxu0 %v262
        %264 = vmatprep.subr.mxu0 0.0
        %265 = vmatpush1.xpose.msra.mxu0 0.0
        %266 = vmatprep.subr.mxu0 0.0
        %267 = vmatpush1.xpose.msra.mxu0 0.0
        %268 = vmatprep.subr.mxu0 0.0
        %269 = vmatpush1.xpose.msra.mxu0 0.0
        %270 = vmatprep.subr.mxu0 0.0
        %271 = vmatpush1.xpose.msra.mxu0 0.0
        %272 = vmatprep.subr.mxu0 0.0
        %273 = vmatpush1.xpose.msra.mxu0 0.0
        %274 = vmatprep.subr.mxu0 0.0
        %275 = vmatpush1.xpose.msra.mxu0 0.0
        %276 = vmatprep.subr.mxu0 0.0
        %277 = vmatpush1.xpose.msra.mxu0 0.0
        %278 = vmatprep.subr.mxu0 0.0
        %279 = vmatpush1.xpose.msra.mxu0 0.0
        %280 = vmatprep.subr.mxu0 0.0
        %281 = vmatpush1.xpose.msra.mxu0 0.0
        %282 = vmatprep.subr.mxu0 0.0
        %283 = vmatpush1.xpose.msra.mxu0 0.0
        %284 = vmatprep.subr.mxu0 0.0
        %285 = vmatpush1.xpose.msra.mxu0 0.0
        %286 = vmatprep.subr.mxu0 0.0
        %287 = vmatpush1.xpose.msra.mxu0 0.0
        %288 = vmatprep.subr.mxu0 0.0
        %289 = vmatpush1.xpose.msra.mxu0 0.0
        %290 = vmatprep.subr.mxu0 0.0
        %291 = vmatpush1.xpose.msra.mxu0 0.0
        %292 = vmatprep.subr.mxu0 0.0
        %293 = vmatpush1.xpose.msra.mxu0 0.0
        %294 = vmatprep.subr.mxu0 0.0
        %295 = vmatpush1.xpose.msra.mxu0 0.0
        %296 = vmatprep.subr.mxu0 0.0
        %297 = vmatpush1.xpose.msra.mxu0 0.0
        %298 = vmatprep.subr.mxu0 0.0
        %299 = vmatpush1.xpose.msra.mxu0 0.0
        %300 = vmatprep.subr.mxu0 0.0
        %301 = vmatpush1.xpose.msra.mxu0 0.0
        %302 = vmatprep.subr.mxu0 0.0
        %303 = vmatpush1.xpose.msra.mxu0 0.0
        %304 = vmatprep.subr.mxu0 0.0
        %305 = vmatpush1.xpose.msra.mxu0 0.0
        %306 = vmatprep.subr.mxu0 0.0
        %307 = vmatpush1.xpose.msra.mxu0 0.0
        %308 = vmatprep.subr.mxu0 0.0
        %309 = vmatpush1.xpose.msra.mxu0 0.0
        %310 = vmatprep.subr.mxu0 0.0
        %311 = vmatpush1.xpose.msra.mxu0 0.0
        %312 = vmatprep.subr.mxu0 0.0
        %313 = vmatpush1.xpose.msra.mxu0 0.0
        %314 = vmatprep.subr.mxu0 0.0
        %315 = vmatpush1.xpose.msra.mxu0 0.0
        %316 = vmatprep.subr.mxu0 0.0
        %317 = vmatpush1.xpose.msra.mxu0 0.0
        %318 = vmatprep.subr.mxu0 0.0
        %319 = vmatpush1.xpose.msra.mxu0 0.0
        %320 = vmatprep.subr.mxu0 0.0
        %321 = vmatpush1.xpose.msra.mxu0 0.0
        %322 = vmatprep.subr.mxu0 0.0
        %323 = vmatpush1.xpose.msra.mxu0 0.0
        %324 = vmatprep.subr.mxu0 0.0
        %325 = vmatpush1.xpose.msra.mxu0 0.0
        %v326 = vand.u32 %v168, 4294901760
        %327 = vmatprep.mubr.f32.mxu0 %v326
        %v328 = vand.u32 %v165, 4294901760
        %329 = vmatmul.mubr.f32.gmra.mrb[0].mxu0 %v328
        %v330 = vpop.f32.mrb[0].mxu0
        %v331 = vadd.f32 %v249, %v330
        %v332 = vpop.f32.mrb[0].mxu0
        %333 = vdwg.mxu0
        %v334 = vand.u32 %v168, 4294901760
        %v335 = vsub.f32 %v168, %v334
        %336 = vmatprep.subr.mxu0 %v335
        %v337 = vand.u32 %v165, 4294901760
        %v338 = vsub.f32 %v165, %v337
        %339 = vmatpush1.xpose.msra.mxu0 %v338
        %340 = vmatprep.subr.mxu0 0.0
        %341 = vmatpush1.xpose.msra.mxu0 0.0
        %342 = vmatprep.subr.mxu0 0.0
        %343 = vmatpush1.xpose.msra.mxu0 0.0
        %344 = vmatprep.subr.mxu0 0.0
        %345 = vmatpush1.xpose.msra.mxu0 0.0
        %346 = vmatprep.subr.mxu0 0.0
        %347 = vmatpush1.xpose.msra.mxu0 0.0
        %348 = vmatprep.subr.mxu0 0.0
        %349 = vmatpush1.xpose.msra.mxu0 0.0
        %350 = vmatprep.subr.mxu0 0.0
        %351 = vmatpush1.xpose.msra.mxu0 0.0
        %352 = vmatprep.subr.mxu0 0.0
        %353 = vmatpush1.xpose.msra.mxu0 0.0
        %354 = vmatprep.subr.mxu0 0.0
        %355 = vmatpush1.xpose.msra.mxu0 0.0
        %356 = vmatprep.subr.mxu0 0.0
        %357 = vmatpush1.xpose.msra.mxu0 0.0
        %358 = vmatprep.subr.mxu0 0.0
        %359 = vmatpush1.xpose.msra.mxu0 0.0
        %360 = vmatprep.subr.mxu0 0.0
        %361 = vmatpush1.xpose.msra.mxu0 0.0
        %362 = vmatprep.subr.mxu0 0.0
        %363 = vmatpush1.xpose.msra.mxu0 0.0
        %364 = vmatprep.subr.mxu0 0.0
        %365 = vmatpush1.xpose.msra.mxu0 0.0
        %366 = vmatprep.subr.mxu0 0.0
        %367 = vmatpush1.xpose.msra.mxu0 0.0
        %368 = vmatprep.subr.mxu0 0.0
        %369 = vmatpush1.xpose.msra.mxu0 0.0
        %370 = vmatprep.subr.mxu0 0.0
        %371 = vmatpush1.xpose.msra.mxu0 0.0
        %372 = vmatprep.subr.mxu0 0.0
        %373 = vmatpush1.xpose.msra.mxu0 0.0
        %374 = vmatprep.subr.mxu0 0.0
        %375 = vmatpush1.xpose.msra.mxu0 0.0
        %376 = vmatprep.subr.mxu0 0.0
        %377 = vmatpush1.xpose.msra.mxu0 0.0
        %378 = vmatprep.subr.mxu0 0.0
        %379 = vmatpush1.xpose.msra.mxu0 0.0
        %380 = vmatprep.subr.mxu0 0.0
        %381 = vmatpush1.xpose.msra.mxu0 0.0
        %382 = vmatprep.subr.mxu0 0.0
        %383 = vmatpush1.xpose.msra.mxu0 0.0
        %384 = vmatprep.subr.mxu0 0.0
        %385 = vmatpush1.xpose.msra.mxu0 0.0
        %386 = vmatprep.subr.mxu0 0.0
        %387 = vmatpush1.xpose.msra.mxu0 0.0
        %388 = vmatprep.subr.mxu0 0.0
        %389 = vmatpush1.xpose.msra.mxu0 0.0
        %390 = vmatprep.subr.mxu0 0.0
        %391 = vmatpush1.xpose.msra.mxu0 0.0
        %392 = vmatprep.subr.mxu0 0.0
        %393 = vmatpush1.xpose.msra.mxu0 0.0
        %394 = vmatprep.subr.mxu0 0.0
        %395 = vmatpush1.xpose.msra.mxu0 0.0
        %396 = vmatprep.subr.mxu0 0.0
        %397 = vmatpush1.xpose.msra.mxu0 0.0
        %398 = vmatprep.subr.mxu0 0.0
        %399 = vmatpush1.xpose.msra.mxu0 0.0
        %400 = vmatprep.subr.mxu0 0.0
        %401 = vmatpush1.xpose.msra.mxu0 0.0
        %v402 = vand.u32 %v168, 4294901760
        %v403 = vsub.f32 %v168, %v402
        %404 = vmatprep.mubr.f32.mxu0 %v403
        %v405 = vand.u32 %v165, 4294901760
        %v406 = vsub.f32 %v165, %v405
        %407 = vmatmul.mubr.f32.gmra.mrb[0].mxu0 %v406
        %v408 = vpop.f32.mrb[0].mxu0
        %v409 = vadd.f32 %v331, %v408
        %v410 = vpop.f32.mrb[0].mxu0
        %411 = vdwg.mxu0
        %v412 = vand.u32 %v168, 4294901760
        %413 = vmatprep.subr.mxu0 %v412
        %v414 = vand.u32 %v165, 4294901760
        %415 = vmatpush1.xpose.msra.mxu0 %v414
        %416 = vmatprep.subr.mxu0 0.0
        %417 = vmatpush1.xpose.msra.mxu0 0.0
        %418 = vmatprep.subr.mxu0 0.0
        %419 = vmatpush1.xpose.msra.mxu0 0.0
        %420 = vmatprep.subr.mxu0 0.0
        %421 = vmatpush1.xpose.msra.mxu0 0.0
        %422 = vmatprep.subr.mxu0 0.0
        %423 = vmatpush1.xpose.msra.mxu0 0.0
        %424 = vmatprep.subr.mxu0 0.0
        %425 = vmatpush1.xpose.msra.mxu0 0.0
        %426 = vmatprep.subr.mxu0 0.0
        %427 = vmatpush1.xpose.msra.mxu0 0.0
        %428 = vmatprep.subr.mxu0 0.0
        %429 = vmatpush1.xpose.msra.mxu0 0.0
        %430 = vmatprep.subr.mxu0 0.0
        %431 = vmatpush1.xpose.msra.mxu0 0.0
        %432 = vmatprep.subr.mxu0 0.0
        %433 = vmatpush1.xpose.msra.mxu0 0.0
        %434 = vmatprep.subr.mxu0 0.0
        %435 = vmatpush1.xpose.msra.mxu0 0.0
        %436 = vmatprep.subr.mxu0 0.0
        %437 = vmatpush1.xpose.msra.mxu0 0.0
        %438 = vmatprep.subr.mxu0 0.0
        %439 = vmatpush1.xpose.msra.mxu0 0.0
        %440 = vmatprep.subr.mxu0 0.0
        %441 = vmatpush1.xpose.msra.mxu0 0.0
        %442 = vmatprep.subr.mxu0 0.0
        %443 = vmatpush1.xpose.msra.mxu0 0.0
        %444 = vmatprep.subr.mxu0 0.0
        %445 = vmatpush1.xpose.msra.mxu0 0.0
        %446 = vmatprep.subr.mxu0 0.0
        %447 = vmatpush1.xpose.msra.mxu0 0.0
        %448 = vmatprep.subr.mxu0 0.0
        %449 = vmatpush1.xpose.msra.mxu0 0.0
        %450 = vmatprep.subr.mxu0 0.0
        %451 = vmatpush1.xpose.msra.mxu0 0.0
        %452 = vmatprep.subr.mxu0 0.0
        %453 = vmatpush1.xpose.msra.mxu0 0.0
        %454 = vmatprep.subr.mxu0 0.0
        %455 = vmatpush1.xpose.msra.mxu0 0.0
        %456 = vmatprep.subr.mxu0 0.0
        %457 = vmatpush1.xpose.msra.mxu0 0.0
        %458 = vmatprep.subr.mxu0 0.0
        %459 = vmatpush1.xpose.msra.mxu0 0.0
        %460 = vmatprep.subr.mxu0 0.0
        %461 = vmatpush1.xpose.msra.mxu0 0.0
        %462 = vmatprep.subr.mxu0 0.0
        %463 = vmatpush1.xpose.msra.mxu0 0.0
        %464 = vmatprep.subr.mxu0 0.0
        %465 = vmatpush1.xpose.msra.mxu0 0.0
        %466 = vmatprep.subr.mxu0 0.0
        %467 = vmatpush1.xpose.msra.mxu0 0.0
        %468 = vmatprep.subr.mxu0 0.0
        %469 = vmatpush1.xpose.msra.mxu0 0.0
        %470 = vmatprep.subr.mxu0 0.0
        %471 = vmatpush1.xpose.msra.mxu0 0.0
        %472 = vmatprep.subr.mxu0 0.0
        %473 = vmatpush1.xpose.msra.mxu0 0.0
        %474 = vmatprep.subr.mxu0 0.0
        %475 = vmatpush1.xpose.msra.mxu0 0.0
        %476 = vmatprep.subr.mxu0 0.0
        %477 = vmatpush1.xpose.msra.mxu0 0.0
        %v478 = vand.u32 %v168, 4294901760
        %v479 = vsub.f32 %v168, %v478
        %v480 = vand.u32 %v479, 4294901760
        %481 = vmatprep.mubr.f32.mxu0 %v480
        %v482 = vand.u32 %v165, 4294901760
        %v483 = vsub.f32 %v165, %v482
        %v484 = vand.u32 %v483, 4294901760
        %485 = vmatmul.mubr.f32.gmra.mrb[0].mxu0 %v484
        %v486 = vpop.f32.mrb[0].mxu0
        %v487 = vadd.f32 %v409, %v486
        %v488 = vpop.f32.mrb[0].mxu0
        %489 = vdwg.mxu0
        %v490 = vand.u32 %v168, 4294901760
        %v491 = vsub.f32 %v168, %v490
        %v492 = vand.u32 %v491, 4294901760
        %493 = vmatprep.subr.mxu0 %v492
        %v494 = vand.u32 %v165, 4294901760
        %v495 = vsub.f32 %v165, %v494
        %v496 = vand.u32 %v495, 4294901760
        %497 = vmatpush1.xpose.msra.mxu0 %v496
        %498 = vmatprep.subr.mxu0 0.0
        %499 = vmatpush1.xpose.msra.mxu0 0.0
        %500 = vmatprep.subr.mxu0 0.0
        %501 = vmatpush1.xpose.msra.mxu0 0.0
        %502 = vmatprep.subr.mxu0 0.0
        %503 = vmatpush1.xpose.msra.mxu0 0.0
        %504 = vmatprep.subr.mxu0 0.0
        %505 = vmatpush1.xpose.msra.mxu0 0.0
        %506 = vmatprep.subr.mxu0 0.0
        %507 = vmatpush1.xpose.msra.mxu0 0.0
        %508 = vmatprep.subr.mxu0 0.0
        %509 = vmatpush1.xpose.msra.mxu0 0.0
        %510 = vmatprep.subr.mxu0 0.0
        %511 = vmatpush1.xpose.msra.mxu0 0.0
        %512 = vmatprep.subr.mxu0 0.0
        %513 = vmatpush1.xpose.msra.mxu0 0.0
        %514 = vmatprep.subr.mxu0 0.0
        %515 = vmatpush1.xpose.msra.mxu0 0.0
        %516 = vmatprep.subr.mxu0 0.0
        %517 = vmatpush1.xpose.msra.mxu0 0.0
        %518 = vmatprep.subr.mxu0 0.0
        %519 = vmatpush1.xpose.msra.mxu0 0.0
        %520 = vmatprep.subr.mxu0 0.0
        %521 = vmatpush1.xpose.msra.mxu0 0.0
        %522 = vmatprep.subr.mxu0 0.0
        %523 = vmatpush1.xpose.msra.mxu0 0.0
        %524 = vmatprep.subr.mxu0 0.0
        %525 = vmatpush1.xpose.msra.mxu0 0.0
        %526 = vmatprep.subr.mxu0 0.0
        %527 = vmatpush1.xpose.msra.mxu0 0.0
        %528 = vmatprep.subr.mxu0 0.0
        %529 = vmatpush1.xpose.msra.mxu0 0.0
        %530 = vmatprep.subr.mxu0 0.0
        %531 = vmatpush1.xpose.msra.mxu0 0.0
        %532 = vmatprep.subr.mxu0 0.0
        %533 = vmatpush1.xpose.msra.mxu0 0.0
        %534 = vmatprep.subr.mxu0 0.0
        %535 = vmatpush1.xpose.msra.mxu0 0.0
        %536 = vmatprep.subr.mxu0 0.0
        %537 = vmatpush1.xpose.msra.mxu0 0.0
        %538 = vmatprep.subr.mxu0 0.0
        %539 = vmatpush1.xpose.msra.mxu0 0.0
        %540 = vmatprep.subr.mxu0 0.0
        %541 = vmatpush1.xpose.msra.mxu0 0.0
        %542 = vmatprep.subr.mxu0 0.0
        %543 = vmatpush1.xpose.msra.mxu0 0.0
        %544 = vmatprep.subr.mxu0 0.0
        %545 = vmatpush1.xpose.msra.mxu0 0.0
        %546 = vmatprep.subr.mxu0 0.0
        %547 = vmatpush1.xpose.msra.mxu0 0.0
        %548 = vmatprep.subr.mxu0 0.0
        %549 = vmatpush1.xpose.msra.mxu0 0.0
        %550 = vmatprep.subr.mxu0 0.0
        %551 = vmatpush1.xpose.msra.mxu0 0.0
        %552 = vmatprep.subr.mxu0 0.0
        %553 = vmatpush1.xpose.msra.mxu0 0.0
        %554 = vmatprep.subr.mxu0 0.0
        %555 = vmatpush1.xpose.msra.mxu0 0.0
        %556 = vmatprep.subr.mxu0 0.0
        %557 = vmatpush1.xpose.msra.mxu0 0.0
        %558 = vmatprep.subr.mxu0 0.0
        %559 = vmatpush1.xpose.msra.mxu0 0.0
        %v560 = vand.u32 %v168, 4294901760
        %561 = vmatprep.mubr.f32.mxu0 %v560
        %v562 = vand.u32 %v165, 4294901760
        %563 = vmatmul.mubr.f32.gmra.mrb[0].mxu0 %v562
        %v564 = vpop.f32.mrb[0].mxu0
        %v565 = vadd.f32 %v487, %v564
        %v566 = vpop.f32.mrb[0].mxu0
        %567 = vdwg.mxu0
        %v568 = vand.u32 %v168, 4294901760
        %569 = vmatprep.subr.mxu0 %v568
        %v570 = vand.u32 %v165, 4294901760
        %571 = vmatpush1.xpose.msra.mxu0 %v570
        %572 = vmatprep.subr.mxu0 0.0
        %573 = vmatpush1.xpose.msra.mxu0 0.0
        %574 = vmatprep.subr.mxu0 0.0
        %575 = vmatpush1.xpose.msra.mxu0 0.0
        %576 = vmatprep.subr.mxu0 0.0
        %577 = vmatpush1.xpose.msra.mxu0 0.0
        %578 = vmatprep.subr.mxu0 0.0
        %579 = vmatpush1.xpose.msra.mxu0 0.0
        %580 = vmatprep.subr.mxu0 0.0
        %581 = vmatpush1.xpose.msra.mxu0 0.0
        %582 = vmatprep.subr.mxu0 0.0
        %583 = vmatpush1.xpose.msra.mxu0 0.0
        %584 = vmatprep.subr.mxu0 0.0
        %585 = vmatpush1.xpose.msra.mxu0 0.0
        %586 = vmatprep.subr.mxu0 0.0
        %587 = vmatpush1.xpose.msra.mxu0 0.0
        %588 = vmatprep.subr.mxu0 0.0
        %589 = vmatpush1.xpose.msra.mxu0 0.0
        %590 = vmatprep.subr.mxu0 0.0
        %591 = vmatpush1.xpose.msra.mxu0 0.0
        %592 = vmatprep.subr.mxu0 0.0
        %593 = vmatpush1.xpose.msra.mxu0 0.0
        %594 = vmatprep.subr.mxu0 0.0
        %595 = vmatpush1.xpose.msra.mxu0 0.0
        %596 = vmatprep.subr.mxu0 0.0
        %597 = vmatpush1.xpose.msra.mxu0 0.0
        %598 = vmatprep.subr.mxu0 0.0
        %599 = vmatpush1.xpose.msra.mxu0 0.0
        %600 = vmatprep.subr.mxu0 0.0
        %601 = vmatpush1.xpose.msra.mxu0 0.0
        %602 = vmatprep.subr.mxu0 0.0
        %603 = vmatpush1.xpose.msra.mxu0 0.0
        %604 = vmatprep.subr.mxu0 0.0
        %605 = vmatpush1.xpose.msra.mxu0 0.0
        %606 = vmatprep.subr.mxu0 0.0
        %607 = vmatpush1.xpose.msra.mxu0 0.0
        %608 = vmatprep.subr.mxu0 0.0
        %609 = vmatpush1.xpose.msra.mxu0 0.0
        %610 = vmatprep.subr.mxu0 0.0
        %611 = vmatpush1.xpose.msra.mxu0 0.0
        %612 = vmatprep.subr.mxu0 0.0
        %613 = vmatpush1.xpose.msra.mxu0 0.0
        %614 = vmatprep.subr.mxu0 0.0
        %615 = vmatpush1.xpose.msra.mxu0 0.0
        %616 = vmatprep.subr.mxu0 0.0
        %617 = vmatpush1.xpose.msra.mxu0 0.0
        %618 = vmatprep.subr.mxu0 0.0
        %619 = vmatpush1.xpose.msra.mxu0 0.0
        %620 = vmatprep.subr.mxu0 0.0
        %621 = vmatpush1.xpose.msra.mxu0 0.0
        %622 = vmatprep.subr.mxu0 0.0
        %623 = vmatpush1.xpose.msra.mxu0 0.0
        %624 = vmatprep.subr.mxu0 0.0
        %625 = vmatpush1.xpose.msra.mxu0 0.0
        %626 = vmatprep.subr.mxu0 0.0
        %627 = vmatpush1.xpose.msra.mxu0 0.0
        %628 = vmatprep.subr.mxu0 0.0
        %629 = vmatpush1.xpose.msra.mxu0 0.0
        %630 = vmatprep.subr.mxu0 0.0
        %631 = vmatpush1.xpose.msra.mxu0 0.0
        %632 = vmatprep.subr.mxu0 0.0
        %633 = vmatpush1.xpose.msra.mxu0 0.0
        %v634 = vand.u32 %v168, 4294901760
        %635 = vmatprep.mubr.f32.mxu0 %v634
        %v636 = vand.u32 %v165, 4294901760
        %637 = vmatmul.mubr.f32.gmra.mrb[0].mxu0 %v636
        %v638 = vpop.f32.mrb[0].mxu0
        %v639 = vadd.f32 %v565, %v638
        %v640 = vpop.f32.mrb[0].mxu0
        %641 = vdwg.mxu0
        %v642 = vadd.f32 %v166, %v639
        %vm643 = vcmask 27648
        %644 = vst.msk [vmem:[%s157] sm:$0xf] %vm643, %v642
        // Predicated region
        $region33: #{tpu_custom_call.1} parent=23 // pred_check
          %p645 = pneg %p159
        $region34: #{tpu_custom_call.1} parent=23 // pred_check_branch
          %647 = sbr.rel (%p645) target = $region36
        $region35: #{tpu_custom_call.1} parent=23 // pred_region
          %v648 = vld [vmem:[%s157] sm:$0xf]
          %v649 = vsel %vm643, %v648, inf
          %650 = vmin.xlane.f32.xlu0 %v649
          %v651 = vpop.xlane.xlu0 %650
          %v652 = vsub.f32 %v651, %v648
          %v653 = vmul.f32 %v652, 1.442695
          %v654 = vpow.pop %v653
          %v655 = vsel %vm643, %v654, 0.0
          %656 = vadd.xlane.f32.xlu0 %v655
          %v657 = vpop.xlane.xlu0 %656
          %v658 = vrcp.pop %v657
          %v659 = vmul.f32 %v654, %v658
          %660 = vst.msk [vmem:[%s157] sm:$0xf] %vm643, %v659
        $region36: #{tpu_custom_call.1} parent=23 // pred_fallthru
          _
        %s661 = sand.u32 %s75, 1
        %s662 = scalar_lea.sflag [#allocation4], %s661
        %s663 = sand.u32 %s75, 1
        %s664 = smul.addr %s663, 4
        %s665 = scalar_lea.vmem [#allocation5], %s664
        // Predicated region
        $region37: #{tpu_custom_call.1} parent=23 // pred_check
          %p666 = pneg %p85
        $region38: #{tpu_custom_call.1} parent=23 // pred_check_branch
          %668 = sbr.rel (%p666) target = $region40
        $region39: #{tpu_custom_call.1} parent=23 // pred_region
          %s670 = ssub.s32 64, 64
          %671 = vsyncadd %s662, %s670
          %s672 = sadd.s32 %s24, %s23
          %s673 = smul.addr %s672, 64
          %s674 = scalar_lea.hbm %s1, %s673
          %s676 = sshll.u32 %s665, 4
          %s677 = int_to_ptr.vmem [resolvable:$true] %s676
          %679 = dma.vmem_to_hbm [thread:$0]  %s677, 64, %s674, %s662
        $region40: #{tpu_custom_call.1} parent=23 // pred_fallthru
          _
      $region24: #{tpu_custom_call.1} parent=5 // pred_fallthru
        _
      %p680 = scmp.le.s32.totalorder 2, %s13
      // Predicated region
      $region41: #{tpu_custom_call.1} parent=5 // pred_check
        %p681 = pneg %p680
      $region42: #{tpu_custom_call.1} parent=5 // pred_check_branch
        %683 = sbr.rel (%p681) target = $region44
      $region43: #{tpu_custom_call.1} parent=5 // pred_region
        %s684 = ssub.s32 %s13, 2
        // Predicated region
        $region45: #{tpu_custom_call.1} parent=43 // pred_check
          %p685 = pneg %p91
        $region46: #{tpu_custom_call.1} parent=43 // pred_check_branch
          %687 = sbr.rel (%p685) target = $region48
        $region47: #{tpu_custom_call.1} parent=43 // pred_region
          %s688 = sand.u32 %s76, 1
          %s689 = scalar_lea.sflag [#allocation4], %s688
          %s690 = sand.u32 %s76, 1
          %s691 = smul.addr %s690, 4
          %s692 = scalar_lea.vmem [#allocation5], %s691
          %693 = dma.done %s689, 64
        $region48: #{tpu_custom_call.1} parent=43 // pred_fallthru
          _
      $region44: #{tpu_custom_call.1} parent=5 // pred_fallthru
        _
    $region6: #{tpu_custom_call.1} parent=1 // loop_footer
      %s17 = sadd.s32 1, %s13
    $region7: #{tpu_custom_call.1} parent=1 // loop_footer_branch
      %12 = sbr.rel target = $region3
    $region8: #{tpu_custom_call.1} parent=1 // loop_exit
      _
    %694 = vsyncpa [#allocation3], 1
    %s695 = scalar_lea.sflag [#allocation3], 1
    %696 = vsyncpa %s695, 1
    %697 = vsyncpa [#allocation4], 1
    %s698 = scalar_lea.sflag [#allocation4], 1
    %699 = vsyncpa %s698, 1

</llo_original>
